<compile_context>
chip_gen: v7x
topology: tpu7x:2x2x1
jax: 0.10.0
libtpu: 0.0.40
codegen_flags: <defaults>
</compile_context>

<pallas_src>
import functools

import jax
import jax.numpy as jnp
from jax.experimental import pallas as pl
from jax.experimental.pallas import tpu as pltpu


def _cdiv(a, b):
    return -(-a // b)


def _round_up(n, m):
    return ((n + m - 1) // m) * m


def _ff_kernel(x_ref, w1_ref, b1_ref, g_ref, be_ref,
               w2_ref, b2_ref, w3_ref, b3_ref, o_ref, *, eps):
    # ---- Linear 1: in-kernel bf16 cast, MXU matmul with f32 accumulation ----
    x = x_ref[...].astype(jnp.bfloat16)
    h = jnp.dot(x, w1_ref[...], preferred_element_type=jnp.float32) + b1_ref[...]

    # ---- LayerNorm over hidden axis (single pass: E[h], E[h^2]; f32) ----
    mu = jnp.mean(h, axis=-1, keepdims=True)
    ms = jnp.mean(h * h, axis=-1, keepdims=True)
    var = jnp.maximum(ms - mu * mu, 0.0)
    h = (h - mu) * jax.lax.rsqrt(var + eps)
    h = h * g_ref[...] + be_ref[...]

    # ---- Linear 2 ----
    h2 = jnp.dot(h.astype(jnp.bfloat16), w2_ref[...],
                 preferred_element_type=jnp.float32) + b2_ref[...]

    # ---- GELU (exact erf form — matches torch.nn.GELU default) ----
    h2 = 0.5 * h2 * (1.0 + jax.lax.erf(h2 * 0.7071067811865476))

    # ---- Linear 3 ----
    out = jnp.dot(h2.astype(jnp.bfloat16), w3_ref[...],
                  preferred_element_type=jnp.float32) + b3_ref[...]
    o_ref[...] = out.astype(o_ref.dtype)


def prepare_params(params, *, lane=128):
    """One-time preprocessing: bf16 weights for the MXU, (1, feat) f32 biases /
    LN params, and w3/b3 lane-padded (only if needed) so output stores are
    lane-dense.  Avoids per-call f32->bf16 weight HBM passes."""
    w1, b1, gamma, beta, w2, b2, w3, b3 = params
    out_dim = w3.shape[1]
    out_pad = _round_up(out_dim, lane)
    w3p, b3p = w3, b3
    if out_pad != out_dim:
        w3p = jnp.pad(w3, ((0, 0), (0, out_pad - out_dim)))
        b3p = jnp.pad(b3, ((0, out_pad - out_dim),))
    return {
        "w1": w1.astype(jnp.bfloat16),
        "b1": b1.reshape(1, -1).astype(jnp.float32),
        "gamma": gamma.reshape(1, -1).astype(jnp.float32),
        "beta": beta.reshape(1, -1).astype(jnp.float32),
        "w2": w2.astype(jnp.bfloat16),
        "b2": b2.reshape(1, -1).astype(jnp.float32),
        "w3": w3p.astype(jnp.bfloat16),
        "b3": b3p.reshape(1, -1).astype(jnp.float32),
        "out_dim": out_dim,
    }


def _vmem_capacity_bytes():
    try:
        return pltpu.get_tpu_info().vmem_capacity_bytes
    except Exception:
        return 128 * 1024 * 1024


def _pick_tile_rows(n_rows, tile_rows):
    n_steps = max(1, _cdiv(n_rows, tile_rows))
    # Megacore friendliness (v7x: 2 TCs/chip): ensure >= 2 grid steps whenever
    # there is enough work to split; extra step is ~free on 1-TC chips.
    if n_steps < 2 and n_rows > 8:
        n_steps = 2
    # Minimize last-block slack; f32 sublane packing needs a multiple of 8.
    return max(8, _round_up(_cdiv(n_rows, n_steps), 8))


def feedforward_out2(x, prepped, *, eps=1e-5, tile_rows=None,
                     vmem_limit_bytes=None):
    """x: (batch, seq, dim) float32 -> (batch, seq, out_dim) float32."""
    B, S, dim = x.shape
    w1, w2, w3 = prepped["w1"], prepped["w2"], prepped["w3"]
    hidden = w1.shape[1]
    hidden2 = w2.shape[1]
    out_pad = w3.shape[1]
    out_dim = prepped["out_dim"]

    cap = _vmem_capacity_bytes()
    if tile_rows is None:
        # v5e/v6e (128 MiB VMEM): bigger row tiles; v7x (64 MiB): stay at 256.
        tile_rows = 512 if cap >= 100 * 1024 * 1024 else 256
    if vmem_limit_bytes is None:
        vmem_limit_bytes = min(int(cap * 0.85), 112 * 1024 * 1024)

    N = B * S
    tr = _pick_tile_rows(N, tile_rows)
    grid = (_cdiv(N, tr),)

    # f32 x goes straight in (bf16 cast in-kernel).  No row padding: Pallas
    # masks the partial last block; its garbage rows stay row-local through
    # every op (matmuls / LN / GELU are row-wise) and their writes are dropped.
    x2 = x.reshape(N, dim)

    # Grid-invariant operands: single-buffered (no double-buffer VMEM waste).
    def const_spec(shape):
        return pl.BlockSpec(shape, lambda i: (0, 0), pipeline_mode=pl.Buffered(1))

    # TODO(synk): for very wide models whose bf16 weights no longer fit VMEM
    # (esp. v7x's 64 MiB), add a second "arbitrary" grid axis tiling hidden2
    # (w2 columns / w3 rows) with an f32 VMEM output accumulator.
    out2 = pl.pallas_call(
        functools.partial(_ff_kernel, eps=eps),
        out_shape=jax.ShapeDtypeStruct((N, out_pad), x.dtype),
        grid_spec=pltpu.PrefetchScalarGridSpec(
            num_scalar_prefetch=0,
            grid=grid,
            in_specs=[
                pl.BlockSpec((tr, dim), lambda i: (i, 0)),  # x tile (pipelined)
                const_spec((dim, hidden)),        # w1 (bf16)
                const_spec((1, hidden)),          # b1
                const_spec((1, hidden)),          # gamma
                const_spec((1, hidden)),          # beta
                const_spec((hidden, hidden2)),    # w2 (bf16)
                const_spec((1, hidden2)),         # b2
                const_spec((hidden2, out_pad)),   # w3 (bf16, lane-padded)
                const_spec((1, out_pad)),         # b3 (lane-padded)
            ],
            out_specs=pl.BlockSpec((tr, out_pad), lambda i: (i, 0)),
        ),
        compiler_params=pltpu.CompilerParams(
            dimension_semantics=("parallel",),
            vmem_limit_bytes=vmem_limit_bytes,
        ),
    )(x2, w1, prepped["b1"], prepped["gamma"], prepped["beta"],
      w2, prepped["b2"], w3, prepped["b3"])

    if out_pad != out_dim:
        out2 = out2[:, :out_dim]
    return out2.reshape(B, S, out_dim)


def init_params(key, dim, hidden_dim, hidden_dim2, out_dim):
    ks = jax.random.split(key, 3)

    def lin(k, fan_in, fan_out):
        bound = 1.0 / jnp.sqrt(fan_in)
        kw, kb = jax.random.split(k)
        w = jax.random.uniform(kw, (fan_in, fan_out), jnp.float32, -bound, bound)
        b = jax.random.uniform(kb, (fan_out,), jnp.float32, -bound, bound)
        return w, b

    w1, b1 = lin(ks[0], dim, hidden_dim)
    gamma = jnp.ones((hidden_dim,), jnp.float32)   # LayerNorm weight init
    beta = jnp.zeros((hidden_dim,), jnp.float32)   # LayerNorm bias init
    w2, b2 = lin(ks[1], hidden_dim, hidden_dim2)
    w3, b3 = lin(ks[2], hidden_dim2, out_dim)
    return (w1, b1, gamma, beta, w2, b2, w3, b3)


def _reference(x, params, eps=1e-5):
    """Pure-JAX reference with the same bf16-operand / f32-accumulate scheme."""
    w1, b1, gamma, beta, w2, b2, w3, b3 = params
    B, S, dim = x.shape
    xb = x.reshape(B * S, dim).astype(jnp.bfloat16)
    h = jnp.dot(xb, w1.astype(jnp.bfloat16),
                preferred_element_type=jnp.float32) + b1
    mu = h.mean(-1, keepdims=True)
    var = ((h - mu) ** 2).mean(-1, keepdims=True)
    h = (h - mu) / jnp.sqrt(var + eps) * gamma + beta
    h2 = jnp.dot(h.astype(jnp.bfloat16), w2.astype(jnp.bfloat16),
                 preferred_element_type=jnp.float32) + b2
    h2 = 0.5 * h2 * (1.0 + jax.lax.erf(h2 / jnp.sqrt(2.0)))
    out = jnp.dot(h2.astype(jnp.bfloat16), w3.astype(jnp.bfloat16),
                  preferred_element_type=jnp.float32) + b3
    return out.reshape(B, S, -1)


if __name__ == "__main__":
    key = jax.random.PRNGKey(0)
    kx, kp = jax.random.split(key)

    # small shapes consistent with the module: tokens of width `dim`
    B, S = 2, 8
    dim, hidden_dim, hidden_dim2, out_dim = 32, 64, 128, 32

    x = jax.random.normal(kx, (B, S, dim), jnp.float32)
    params = init_params(kp, dim, hidden_dim, hidden_dim2, out_dim)
    prepped = prepare_params(params)   # one-time weight prep (bf16 / lane pad)

    out = feedforward_out2(x, prepped)
    out = jax.block_until_ready(out)

    ref = _reference(x, params)
    assert out.shape == (B, S, out_dim)
    assert jnp.allclose(out, ref, atol=2e-3, rtol=2e-3), "mismatch vs reference"

    print("KERNEL_OK")
</pallas_src>

<mosaic_0001>
module attributes {stable_mosaic.version = 11 : i64} {
  func.func @_ff_kernel(%arg0: i32, %arg1: memref<8x32xf32, #tpu.memory_space<vmem>>, %arg2: memref<32x64xbf16, #tpu.memory_space<vmem>>, %arg3: memref<1x64xf32, #tpu.memory_space<vmem>>, %arg4: memref<1x64xf32, #tpu.memory_space<vmem>>, %arg5: memref<1x64xf32, #tpu.memory_space<vmem>>, %arg6: memref<64x128xbf16, #tpu.memory_space<vmem>>, %arg7: memref<1x128xf32, #tpu.memory_space<vmem>>, %arg8: memref<128x128xbf16, #tpu.memory_space<vmem>>, %arg9: memref<1x128xf32, #tpu.memory_space<vmem>>, %arg10: memref<8x128xf32, #tpu.memory_space<vmem>>) attributes {dimension_semantics = [#tpu.dimension_semantics<parallel>], iteration_bounds = array<i64: 2>, scalar_prefetch = 0 : i64, scratch_operands = 0 : i64, tpu.core_type = #tpu.core_type<tc>, window_params = [{transform_indices = @transform_0, window_bounds = array<i64: 8, 32>}, {pipeline_mode = #tpu.pipeline_mode<synchronous>, transform_indices = @transform_1, window_bounds = array<i64: 32, 64>}, {pipeline_mode = #tpu.pipeline_mode<synchronous>, transform_indices = @transform_2, window_bounds = array<i64: 1, 64>}, {pipeline_mode = #tpu.pipeline_mode<synchronous>, transform_indices = @transform_3, window_bounds = array<i64: 1, 64>}, {pipeline_mode = #tpu.pipeline_mode<synchronous>, transform_indices = @transform_4, window_bounds = array<i64: 1, 64>}, {pipeline_mode = #tpu.pipeline_mode<synchronous>, transform_indices = @transform_5, window_bounds = array<i64: 64, 128>}, {pipeline_mode = #tpu.pipeline_mode<synchronous>, transform_indices = @transform_6, window_bounds = array<i64: 1, 128>}, {pipeline_mode = #tpu.pipeline_mode<synchronous>, transform_indices = @transform_7, window_bounds = array<i64: 128, 128>}, {pipeline_mode = #tpu.pipeline_mode<synchronous>, transform_indices = @transform_8, window_bounds = array<i64: 1, 128>}, {transform_indices = @transform_9, window_bounds = array<i64: 8, 128>}]} {
    %c0 = arith.constant 0 : index
    %c0_0 = arith.constant 0 : index
    %0 = vector.load %arg1[%c0, %c0_0] : memref<8x32xf32, #tpu.memory_space<vmem>>, vector<8x32xf32>
    %1 = arith.truncf %0 : vector<8x32xf32> to vector<8x32xbf16>
    %c0_1 = arith.constant 0 : index
    %c0_2 = arith.constant 0 : index
    %2 = vector.load %arg2[%c0_1, %c0_2] : memref<32x64xbf16, #tpu.memory_space<vmem>>, vector<32x64xbf16>
    %cst = arith.constant dense<0.000000e+00> : vector<8x64xf32>
    %3 = tpu.matmul %1, %2, %cst {dimension_numbers = #tpu.dot_dimension_numbers<[1], [0], [0], [1], [0, 0, 1, 1], [], []>} : vector<8x32xbf16>, vector<32x64xbf16>, vector<8x64xf32> -> vector<8x64xf32>
    %c0_3 = arith.constant 0 : index
    %c0_4 = arith.constant 0 : index
    %4 = vector.load %arg3[%c0_3, %c0_4] : memref<1x64xf32, #tpu.memory_space<vmem>>, vector<1x64xf32>
    %5 = vector.broadcast %4 : vector<1x64xf32> to vector<8x64xf32>
    %6 = arith.addf %3, %5 : vector<8x64xf32>
    %cst_5 = arith.constant dense<0.000000e+00> : vector<8xf32>
    %7 = vector.multi_reduction <add>, %6, %cst_5 [1] : vector<8x64xf32> to vector<8xf32>
    %8 = vector.shape_cast %7 : vector<8xf32> to vector<8x1xf32>
    %cst_6 = arith.constant 6.400000e+01 : f32
    %9 = vector.broadcast %cst_6 : f32 to vector<8x1xf32>
    %10 = arith.divf %8, %9 : vector<8x1xf32>
    %11 = arith.mulf %6, %6 : vector<8x64xf32>
    %cst_7 = arith.constant dense<0.000000e+00> : vector<8xf32>
    %12 = vector.multi_reduction <add>, %11, %cst_7 [1] : vector<8x64xf32> to vector<8xf32>
    %13 = vector.shape_cast %12 : vector<8xf32> to vector<8x1xf32>
    %cst_8 = arith.constant 6.400000e+01 : f32
    %14 = vector.broadcast %cst_8 : f32 to vector<8x1xf32>
    %15 = arith.divf %13, %14 : vector<8x1xf32>
    %16 = arith.mulf %10, %10 : vector<8x1xf32>
    %17 = arith.subf %15, %16 : vector<8x1xf32>
    %cst_9 = arith.constant 0.000000e+00 : f32
    %18 = vector.broadcast %cst_9 : f32 to vector<8x1xf32>
    %19 = arith.maximumf %17, %18 : vector<8x1xf32>
    %20 = vector.broadcast %10 : vector<8x1xf32> to vector<8x64xf32>
    %21 = arith.subf %6, %20 : vector<8x64xf32>
    %cst_10 = arith.constant 9.99999974E-6 : f32
    %22 = vector.broadcast %cst_10 : f32 to vector<8x1xf32>
    %23 = arith.addf %19, %22 : vector<8x1xf32>
    %24 = math.rsqrt %23 : vector<8x1xf32>
    %25 = vector.broadcast %24 : vector<8x1xf32> to vector<8x64xf32>
    %26 = arith.mulf %21, %25 : vector<8x64xf32>
    %c0_11 = arith.constant 0 : index
    %c0_12 = arith.constant 0 : index
    %27 = vector.load %arg4[%c0_11, %c0_12] : memref<1x64xf32, #tpu.memory_space<vmem>>, vector<1x64xf32>
    %28 = vector.broadcast %27 : vector<1x64xf32> to vector<8x64xf32>
    %29 = arith.mulf %26, %28 : vector<8x64xf32>
    %c0_13 = arith.constant 0 : index
    %c0_14 = arith.constant 0 : index
    %30 = vector.load %arg5[%c0_13, %c0_14] : memref<1x64xf32, #tpu.memory_space<vmem>>, vector<1x64xf32>
    %31 = vector.broadcast %30 : vector<1x64xf32> to vector<8x64xf32>
    %32 = arith.addf %29, %31 : vector<8x64xf32>
    %33 = arith.truncf %32 : vector<8x64xf32> to vector<8x64xbf16>
    %c0_15 = arith.constant 0 : index
    %c0_16 = arith.constant 0 : index
    %34 = vector.load %arg6[%c0_15, %c0_16] : memref<64x128xbf16, #tpu.memory_space<vmem>>, vector<64x128xbf16>
    %cst_17 = arith.constant dense<0.000000e+00> : vector<8x128xf32>
    %35 = tpu.matmul %33, %34, %cst_17 {dimension_numbers = #tpu.dot_dimension_numbers<[1], [0], [0], [1], [0, 0, 1, 1], [], []>} : vector<8x64xbf16>, vector<64x128xbf16>, vector<8x128xf32> -> vector<8x128xf32>
    %c0_18 = arith.constant 0 : index
    %c0_19 = arith.constant 0 : index
    %36 = vector.load %arg7[%c0_18, %c0_19] : memref<1x128xf32, #tpu.memory_space<vmem>>, vector<1x128xf32>
    %37 = vector.broadcast %36 : vector<1x128xf32> to vector<8x128xf32>
    %38 = arith.addf %35, %37 : vector<8x128xf32>
    %cst_20 = arith.constant 5.000000e-01 : f32
    %39 = vector.broadcast %cst_20 : f32 to vector<8x128xf32>
    %40 = arith.mulf %39, %38 : vector<8x128xf32>
    %cst_21 = arith.constant 0.707106769 : f32
    %41 = vector.broadcast %cst_21 : f32 to vector<8x128xf32>
    %42 = arith.mulf %38, %41 : vector<8x128xf32>
    %43 = math.erf %42 : vector<8x128xf32>
    %cst_22 = arith.constant 1.000000e+00 : f32
    %44 = vector.broadcast %cst_22 : f32 to vector<8x128xf32>
    %45 = arith.addf %44, %43 : vector<8x128xf32>
    %46 = arith.mulf %40, %45 : vector<8x128xf32>
    %47 = arith.truncf %46 : vector<8x128xf32> to vector<8x128xbf16>
    %c0_23 = arith.constant 0 : index
    %c0_24 = arith.constant 0 : index
    %48 = vector.load %arg8[%c0_23, %c0_24] : memref<128x128xbf16, #tpu.memory_space<vmem>>, vector<128x128xbf16>
    %cst_25 = arith.constant dense<0.000000e+00> : vector<8x128xf32>
    %49 = tpu.matmul %47, %48, %cst_25 {dimension_numbers = #tpu.dot_dimension_numbers<[1], [0], [0], [1], [0, 0, 1, 1], [], []>} : vector<8x128xbf16>, vector<128x128xbf16>, vector<8x128xf32> -> vector<8x128xf32>
    %c0_26 = arith.constant 0 : index
    %c0_27 = arith.constant 0 : index
    %50 = vector.load %arg9[%c0_26, %c0_27] : memref<1x128xf32, #tpu.memory_space<vmem>>, vector<1x128xf32>
    %51 = vector.broadcast %50 : vector<1x128xf32> to vector<8x128xf32>
    %52 = arith.addf %49, %51 : vector<8x128xf32>
    %c0_28 = arith.constant 0 : index
    %c0_29 = arith.constant 0 : index
    %53 = vector.load %arg10[%c0_28, %c0_29] : memref<8x128xf32, #tpu.memory_space<vmem>>, vector<8x128xf32>
    tpu.vector_store %arg10[%c0_28, %c0_29], %52 {strides = array<i32>} : memref<8x128xf32, #tpu.memory_space<vmem>>, vector<8x128xf32>,
    return
  }
  func.func @transform_0(%arg0: i32) -> (i32, i32) {
    %c0_i32 = arith.constant 0 : i32
    %c0_i32_0 = arith.constant 0 : i32
    return %arg0, %c0_i32 : i32, i32
  }
  func.func @transform_1(%arg0: i32) -> (i32, i32) {
    %c0_i32 = arith.constant 0 : i32
    %c0_i32_0 = arith.constant 0 : i32
    %c0_i32_1 = arith.constant 0 : i32
    return %c0_i32, %c0_i32_0 : i32, i32
  }
  func.func @transform_2(%arg0: i32) -> (i32, i32) {
    %c0_i32 = arith.constant 0 : i32
    %c0_i32_0 = arith.constant 0 : i32
    %c0_i32_1 = arith.constant 0 : i32
    return %c0_i32, %c0_i32_0 : i32, i32
  }
  func.func @transform_3(%arg0: i32) -> (i32, i32) {
    %c0_i32 = arith.constant 0 : i32
    %c0_i32_0 = arith.constant 0 : i32
    %c0_i32_1 = arith.constant 0 : i32
    return %c0_i32, %c0_i32_0 : i32, i32
  }
  func.func @transform_4(%arg0: i32) -> (i32, i32) {
    %c0_i32 = arith.constant 0 : i32
    %c0_i32_0 = arith.constant 0 : i32
    %c0_i32_1 = arith.constant 0 : i32
    return %c0_i32, %c0_i32_0 : i32, i32
  }
  func.func @transform_5(%arg0: i32) -> (i32, i32) {
    %c0_i32 = arith.constant 0 : i32
    %c0_i32_0 = arith.constant 0 : i32
    %c0_i32_1 = arith.constant 0 : i32
    return %c0_i32, %c0_i32_0 : i32, i32
  }
  func.func @transform_6(%arg0: i32) -> (i32, i32) {
    %c0_i32 = arith.constant 0 : i32
    %c0_i32_0 = arith.constant 0 : i32
    %c0_i32_1 = arith.constant 0 : i32
    return %c0_i32, %c0_i32_0 : i32, i32
  }
  func.func @transform_7(%arg0: i32) -> (i32, i32) {
    %c0_i32 = arith.constant 0 : i32
    %c0_i32_0 = arith.constant 0 : i32
    %c0_i32_1 = arith.constant 0 : i32
    return %c0_i32, %c0_i32_0 : i32, i32
  }
  func.func @transform_8(%arg0: i32) -> (i32, i32) {
    %c0_i32 = arith.constant 0 : i32
    %c0_i32_0 = arith.constant 0 : i32
    %c0_i32_1 = arith.constant 0 : i32
    return %c0_i32, %c0_i32_0 : i32, i32
  }
  func.func @transform_9(%arg0: i32) -> (i32, i32) {
    %c0_i32 = arith.constant 0 : i32
    %c0_i32_0 = arith.constant 0 : i32
    return %arg0, %c0_i32 : i32, i32
  }
}

</mosaic_0001>

<llo_original>
// kernel: tpu_custom_call.1
$region0: #{tpu_custom_call.1}
  #allocation0 [shape = 'u32[]', space=smem, size = 0x4, offset = 0x4, fixed_abs, tag = 'smem constant byte address 0x4 - core index']
  #allocation1 [shape = 'u32[144,128]{1,0:T(1,128)}', space=vmem, size = 0x12000, scoped, tag = 'internal scratch']
  %s0 = inlined_call_operand.hbm [shape: f32[16,32], index: 0, kind: input, shape index: {}]
  %s1 = inlined_call_operand.hbm [shape: bf16[32,64], index: 1, kind: input, shape index: {}]
  %s2 = inlined_call_operand.hbm [shape: f32[1,64], index: 2, kind: input, shape index: {}]
  %s3 = inlined_call_operand.hbm [shape: f32[1,64], index: 3, kind: input, shape index: {}]
  %s4 = inlined_call_operand.hbm [shape: f32[1,64], index: 4, kind: input, shape index: {}]
  %s5 = inlined_call_operand.hbm [shape: bf16[64,128], index: 5, kind: input, shape index: {}]
  %s6 = inlined_call_operand.hbm [shape: f32[1,128], index: 6, kind: input, shape index: {}]
  %s7 = inlined_call_operand.hbm [shape: bf16[128,128], index: 7, kind: input, shape index: {}]
  %s8 = inlined_call_operand.hbm [shape: f32[1,128], index: 8, kind: input, shape index: {}]
  %s9 = inlined_call_operand.hbm [shape: f32[16,128], index: 9, kind: output, shape index: {}]
  %s10 = sld [smem:[#allocation0]]
  $region105: #{tpu_custom_call.1} parent=0
    _
  %s12 = ssub.s32 1, %s10
  %s13 = scalar_select 0, %s12, %s10
  $region1: #{tpu_custom_call.1} parent=0
    #allocation2 [shape = 'u8[8192]{0}', space=vmem, size = 0x2000, scoped, tag = 'input window, operand 0']
    #allocation3 [shape = 's32[2]{0}', space=sflag, size = 0x8, scoped, tag = 'scoped memory for tpu_custom_call.1']
    #allocation4 [shape = 's32[2]{0}', space=sflag, size = 0x8, scoped, tag = 'scoped memory for tpu_custom_call.1']
    #allocation5 [shape = 'u8[8192]{0}', space=vmem, size = 0x2000, scoped, tag = 'input window, operand 1, single buffered']
    #allocation6 [shape = 's32[1]{0}', space=sflag, size = 0x4, scoped, tag = 'scoped memory for tpu_custom_call.1']
    #allocation7 [shape = 'u8[512]{0}', space=vmem, size = 0x400, scoped, tag = 'input window, operand 2, single buffered']
    #allocation8 [shape = 'u8[512]{0}', space=vmem, size = 0x400, scoped, tag = 'input window, operand 3, single buffered']
    #allocation9 [shape = 's32[1]{0}', space=sflag, size = 0x4, scoped, tag = 'scoped memory for tpu_custom_call.1']
    #allocation10 [shape = 'u8[512]{0}', space=vmem, size = 0x400, scoped, tag = 'input window, operand 4, single buffered']
    #allocation11 [shape = 'u8[16384]{0}', space=vmem, size = 0x4000, scoped, tag = 'input window, operand 5, single buffered']
    #allocation12 [shape = 's32[1]{0}', space=sflag, size = 0x4, scoped, tag = 'scoped memory for tpu_custom_call.1']
    #allocation13 [shape = 'u8[512]{0}', space=vmem, size = 0x400, scoped, tag = 'input window, operand 6, single buffered']
    #allocation14 [shape = 'u8[32768]{0}', space=vmem, size = 0x8000, scoped, tag = 'input window, operand 7, single buffered']
    #allocation15 [shape = 's32[1]{0}', space=sflag, size = 0x4, scoped, tag = 'scoped memory for tpu_custom_call.1']
    #allocation16 [shape = 'u8[512]{0}', space=vmem, size = 0x400, scoped, tag = 'input window, operand 8, single buffered']
    #allocation17 [shape = 'u8[8192]{0}', space=vmem, size = 0x2000, scoped, tag = 'output window, operand 0']
    %14 = vsyncpa [#allocation3], 0
    %s15 = scalar_lea.sflag [#allocation3], 1
    %16 = vsyncpa %s15, 0
    %17 = vsyncpa [#allocation6], 0
    %18 = vsyncpa [#allocation9], 0
    %19 = vsyncpa [#allocation12], 0
    %20 = vsyncpa [#allocation15], 0
    %21 = vsyncpa [#allocation4], 0
    %s22 = scalar_lea.sflag [#allocation4], 1
    %23 = vsyncpa %s22, 0
    loop: start=0, step=1, limit=4
    $region2: #{tpu_custom_call.1} parent=1 // loop_pre_header
      _
    $region3: #{tpu_custom_call.1} parent=1 // loop_header
      %s25 = sphi 0, %s29
      %p26 = scmp.ge.s32.totalorder %s25, 4
      %s35 = sphi 0, %s37
      %s38 = sphi 0, %s35
      %s39 = sphi 0, %s38
      %s55 = sphi 0, %s39
      %s59 = sphi 0, %s59
      %s61 = sphi 0, %s59
      %s62 = sphi 0, %s61
      %s76 = sphi 0, %s62
      %s80 = sphi 0, %s80
      %s82 = sphi 0, %s80
      %s83 = sphi 0, %s82
      %s97 = sphi 0, %s83
      %s101 = sphi 0, %s101
      %s103 = sphi 0, %s101
      %s104 = sphi 0, %s103
      %s118 = sphi 0, %s104
      %s122 = sphi 0, %s122
      %s124 = sphi 0, %s122
      %s125 = sphi 0, %s124
      %s139 = sphi 0, %s125
      %s143 = sphi 0, %s143
      %s145 = sphi 0, %s143
      %s146 = sphi 0, %s145
      %s160 = sphi 0, %s146
      %s164 = sphi 0, %s164
      %s166 = sphi 0, %s164
      %s167 = sphi 0, %s166
      %s181 = sphi 0, %s167
      %s185 = sphi 0, %s185
      %s187 = sphi 0, %s185
      %s188 = sphi 0, %s187
      %s202 = sphi 0, %s188
      %s206 = sphi 0, %s206
      %s208 = sphi 0, %s206
      %s209 = sphi 0, %s208
      %s223 = sphi 0, %s209
      %s229 = sphi 0, %s231
      %s232 = sphi 0, %s229
      %s233 = sphi 0, %s232
      %s249 = sphi 0, %s233
    $region4: #{tpu_custom_call.1} parent=1 // loop_header_branch
      %28 = sbr.rel (%p26) target = $region8
    $region5: #{tpu_custom_call.1} parent=1 // loop_body
      %s30 = ssub.s32 %s25, 1
      %s31 = ssub.s32 %s25, 2
      %s32 = sadd.s32 %s25, 1
      %s33 = ssub.s32 %s25, %s32
      %p34 = scmp.eq.s32.totalorder %s33, 0
      %s36 = sadd.s32 %s35, 1
      %s37 = scalar_select %p34, %s35, %s36
      %p40 = pneg %p34
      %p41 = scmp.eq.s32.totalorder %s25, 1
      %p42 = por %p40, %p41
      %p43 = scmp.ne.s32.totalorder %s35, %s38
      %p44 = scmp.eq.s32.totalorder %s25, 0
      %p45 = por %p43, %p44
      %p46 = scmp.ne.s32.totalorder %s35, %s38
      %p47 = scmp.eq.s32.totalorder %s30, 1
      %p48 = por %p46, %p47
      %p49 = scmp.ne.s32.totalorder %s38, %s39
      %p50 = scmp.eq.s32.totalorder %s30, 0
      %p51 = por %p49, %p50
      %p52 = scmp.ne.s32.totalorder %s38, %s39
      %p53 = scmp.eq.s32.totalorder %s31, 1
      %p54 = por %p52, %p53
      %p56 = scmp.ne.s32.totalorder %s39, %s55
      %p57 = scmp.eq.s32.totalorder %s31, 0
      %p58 = por %p56, %p57
      %s60 = sadd.s32 %s59, 1
      %p63 = scmp.eq.s32.totalorder %s25, 1
      %p64 = scmp.ne.s32.totalorder %s59, %s61
      %p65 = scmp.eq.s32.totalorder %s25, 0
      %p66 = por %p64, %p65
      %p67 = scmp.ne.s32.totalorder %s59, %s61
      %p68 = scmp.eq.s32.totalorder %s30, 1
      %p69 = por %p67, %p68
      %p70 = scmp.ne.s32.totalorder %s61, %s62
      %p71 = scmp.eq.s32.totalorder %s30, 0
      %p72 = por %p70, %p71
      %p73 = scmp.ne.s32.totalorder %s61, %s62
      %p74 = scmp.eq.s32.totalorder %s31, 1
      %p75 = por %p73, %p74
      %p77 = scmp.ne.s32.totalorder %s62, %s76
      %p78 = scmp.eq.s32.totalorder %s31, 0
      %p79 = por %p77, %p78
      %s81 = sadd.s32 %s80, 1
      %p84 = scmp.eq.s32.totalorder %s25, 1
      %p85 = scmp.ne.s32.totalorder %s80, %s82
      %p86 = scmp.eq.s32.totalorder %s25, 0
      %p87 = por %p85, %p86
      %p88 = scmp.ne.s32.totalorder %s80, %s82
      %p89 = scmp.eq.s32.totalorder %s30, 1
      %p90 = por %p88, %p89
      %p91 = scmp.ne.s32.totalorder %s82, %s83
      %p92 = scmp.eq.s32.totalorder %s30, 0
      %p93 = por %p91, %p92
      %p94 = scmp.ne.s32.totalorder %s82, %s83
      %p95 = scmp.eq.s32.totalorder %s31, 1
      %p96 = por %p94, %p95
      %p98 = scmp.ne.s32.totalorder %s83, %s97
      %p99 = scmp.eq.s32.totalorder %s31, 0
      %p100 = por %p98, %p99
      %s102 = sadd.s32 %s101, 1
      %p105 = scmp.eq.s32.totalorder %s25, 1
      %p106 = scmp.ne.s32.totalorder %s101, %s103
      %p107 = scmp.eq.s32.totalorder %s25, 0
      %p108 = por %p106, %p107
      %p109 = scmp.ne.s32.totalorder %s101, %s103
      %p110 = scmp.eq.s32.totalorder %s30, 1
      %p111 = por %p109, %p110
      %p112 = scmp.ne.s32.totalorder %s103, %s104
      %p113 = scmp.eq.s32.totalorder %s30, 0
      %p114 = por %p112, %p113
      %p115 = scmp.ne.s32.totalorder %s103, %s104
      %p116 = scmp.eq.s32.totalorder %s31, 1
      %p117 = por %p115, %p116
      %p119 = scmp.ne.s32.totalorder %s104, %s118
      %p120 = scmp.eq.s32.totalorder %s31, 0
      %p121 = por %p119, %p120
      %s123 = sadd.s32 %s122, 1
      %p126 = scmp.eq.s32.totalorder %s25, 1
      %p127 = scmp.ne.s32.totalorder %s122, %s124
      %p128 = scmp.eq.s32.totalorder %s25, 0
      %p129 = por %p127, %p128
      %p130 = scmp.ne.s32.totalorder %s122, %s124
      %p131 = scmp.eq.s32.totalorder %s30, 1
      %p132 = por %p130, %p131
      %p133 = scmp.ne.s32.totalorder %s124, %s125
      %p134 = scmp.eq.s32.totalorder %s30, 0
      %p135 = por %p133, %p134
      %p136 = scmp.ne.s32.totalorder %s124, %s125
      %p137 = scmp.eq.s32.totalorder %s31, 1
      %p138 = por %p136, %p137
      %p140 = scmp.ne.s32.totalorder %s125, %s139
      %p141 = scmp.eq.s32.totalorder %s31, 0
      %p142 = por %p140, %p141
      %s144 = sadd.s32 %s143, 1
      %p147 = scmp.eq.s32.totalorder %s25, 1
      %p148 = scmp.ne.s32.totalorder %s143, %s145
      %p149 = scmp.eq.s32.totalorder %s25, 0
      %p150 = por %p148, %p149
      %p151 = scmp.ne.s32.totalorder %s143, %s145
      %p152 = scmp.eq.s32.totalorder %s30, 1
      %p153 = por %p151, %p152
      %p154 = scmp.ne.s32.totalorder %s145, %s146
      %p155 = scmp.eq.s32.totalorder %s30, 0
      %p156 = por %p154, %p155
      %p157 = scmp.ne.s32.totalorder %s145, %s146
      %p158 = scmp.eq.s32.totalorder %s31, 1
      %p159 = por %p157, %p158
      %p161 = scmp.ne.s32.totalorder %s146, %s160
      %p162 = scmp.eq.s32.totalorder %s31, 0
      %p163 = por %p161, %p162
      %s165 = sadd.s32 %s164, 1
      %p168 = scmp.eq.s32.totalorder %s25, 1
      %p169 = scmp.ne.s32.totalorder %s164, %s166
      %p170 = scmp.eq.s32.totalorder %s25, 0
      %p171 = por %p169, %p170
      %p172 = scmp.ne.s32.totalorder %s164, %s166
      %p173 = scmp.eq.s32.totalorder %s30, 1
      %p174 = por %p172, %p173
      %p175 = scmp.ne.s32.totalorder %s166, %s167
      %p176 = scmp.eq.s32.totalorder %s30, 0
      %p177 = por %p175, %p176
      %p178 = scmp.ne.s32.totalorder %s166, %s167
      %p179 = scmp.eq.s32.totalorder %s31, 1
      %p180 = por %p178, %p179
      %p182 = scmp.ne.s32.totalorder %s167, %s181
      %p183 = scmp.eq.s32.totalorder %s31, 0
      %p184 = por %p182, %p183
      %s186 = sadd.s32 %s185, 1
      %p189 = scmp.eq.s32.totalorder %s25, 1
      %p190 = scmp.ne.s32.totalorder %s185, %s187
      %p191 = scmp.eq.s32.totalorder %s25, 0
      %p192 = por %p190, %p191
      %p193 = scmp.ne.s32.totalorder %s185, %s187
      %p194 = scmp.eq.s32.totalorder %s30, 1
      %p195 = por %p193, %p194
      %p196 = scmp.ne.s32.totalorder %s187, %s188
      %p197 = scmp.eq.s32.totalorder %s30, 0
      %p198 = por %p196, %p197
      %p199 = scmp.ne.s32.totalorder %s187, %s188
      %p200 = scmp.eq.s32.totalorder %s31, 1
      %p201 = por %p199, %p200
      %p203 = scmp.ne.s32.totalorder %s188, %s202
      %p204 = scmp.eq.s32.totalorder %s31, 0
      %p205 = por %p203, %p204
      %s207 = sadd.s32 %s206, 1
      %p210 = scmp.eq.s32.totalorder %s25, 1
      %p211 = scmp.ne.s32.totalorder %s206, %s208
      %p212 = scmp.eq.s32.totalorder %s25, 0
      %p213 = por %p211, %p212
      %p214 = scmp.ne.s32.totalorder %s206, %s208
      %p215 = scmp.eq.s32.totalorder %s30, 1
      %p216 = por %p214, %p215
      %p217 = scmp.ne.s32.totalorder %s208, %s209
      %p218 = scmp.eq.s32.totalorder %s30, 0
      %p219 = por %p217, %p218
      %p220 = scmp.ne.s32.totalorder %s208, %s209
      %p221 = scmp.eq.s32.totalorder %s31, 1
      %p222 = por %p220, %p221
      %p224 = scmp.ne.s32.totalorder %s209, %s223
      %p225 = scmp.eq.s32.totalorder %s31, 0
      %p226 = por %p224, %p225
      %s227 = ssub.s32 %s25, %s32
      %p228 = scmp.eq.s32.totalorder %s227, 0
      %s230 = sadd.s32 %s229, 1
      %s231 = scalar_select %p228, %s229, %s230
      %p234 = pneg %p228
      %p235 = scmp.eq.s32.totalorder %s25, 1
      %p236 = por %p234, %p235
      %p237 = scmp.ne.s32.totalorder %s229, %s232
      %p238 = scmp.eq.s32.totalorder %s25, 0
      %p239 = por %p237, %p238
      %p240 = scmp.ne.s32.totalorder %s229, %s232
      %p241 = scmp.eq.s32.totalorder %s30, 1
      %p242 = por %p240, %p241
      %p243 = scmp.ne.s32.totalorder %s232, %s233
      %p244 = scmp.eq.s32.totalorder %s30, 0
      %p245 = por %p243, %p244
      %p246 = scmp.ne.s32.totalorder %s232, %s233
      %p247 = scmp.eq.s32.totalorder %s31, 1
      %p248 = por %p246, %p247
      %p250 = scmp.ne.s32.totalorder %s233, %s249
      %p251 = scmp.eq.s32.totalorder %s31, 0
      %p252 = por %p250, %p251
      %p253 = scmp.le.s32.totalorder 1, %s25
      %p254 = scmp.lt.s32.totalorder %s25, 3
      %p255 = pnand %p253, %p254
      %p256 = pneg %p255
      // Predicated region
      $region9: #{tpu_custom_call.1} parent=5 // pred_check
        _
      $region10: #{tpu_custom_call.1} parent=5 // pred_check_branch
        %258 = sbr.rel (%p255) target = $region12
      $region11: #{tpu_custom_call.1} parent=5 // pred_region
        %s259 = ssub.s32 %s25, 1
        // Predicated region
        $region13: #{tpu_custom_call.1} parent=11 // pred_check
          %p260 = pneg %p72
        $region14: #{tpu_custom_call.1} parent=11 // pred_check_branch
          %262 = sbr.rel (%p260) target = $region16
        $region15: #{tpu_custom_call.1} parent=11 // pred_region
          %s264 = ssub.s32 256, 256
          %265 = vsyncadd [#allocation6], %s264
          %s266 = sshll.u32 [#allocation5], 4
          %s267 = int_to_ptr.vmem [resolvable:$true] %s266
          %272 = dma.hbm_to_vmem [thread:$0]  %s1, 256, %s267, [#allocation6], 64, 64, 4
        $region16: #{tpu_custom_call.1} parent=11 // pred_fallthru
          _
        // Predicated region
        $region17: #{tpu_custom_call.1} parent=11 // pred_check
          %p273 = pneg %p93
        $region18: #{tpu_custom_call.1} parent=11 // pred_check_branch
          %275 = sbr.rel (%p273) target = $region20
        $region19: #{tpu_custom_call.1} parent=11 // pred_region
          %s277 = ssub.s32 16, 16
          %278 = vsyncadd [#allocation6], %s277
          %s280 = sshll.u32 [#allocation7], 4
          %s281 = int_to_ptr.vmem [resolvable:$true] %s280
          %283 = dma.hbm_to_vmem [thread:$0]  %s2, 16, %s281, [#allocation6]
        $region20: #{tpu_custom_call.1} parent=11 // pred_fallthru
          _
        // Predicated region
        $region21: #{tpu_custom_call.1} parent=11 // pred_check
          %p284 = pneg %p114
        $region22: #{tpu_custom_call.1} parent=11 // pred_check_branch
          %286 = sbr.rel (%p284) target = $region24
        $region23: #{tpu_custom_call.1} parent=11 // pred_region
          %s288 = ssub.s32 16, 16
          %289 = vsyncadd [#allocation9], %s288
          %s291 = sshll.u32 [#allocation8], 4
          %s292 = int_to_ptr.vmem [resolvable:$true] %s291
          %294 = dma.hbm_to_vmem [thread:$0]  %s3, 16, %s292, [#allocation9]
        $region24: #{tpu_custom_call.1} parent=11 // pred_fallthru
          _
        // Predicated region
        $region25: #{tpu_custom_call.1} parent=11 // pred_check
          %p295 = pneg %p135
        $region26: #{tpu_custom_call.1} parent=11 // pred_check_branch
          %297 = sbr.rel (%p295) target = $region28
        $region27: #{tpu_custom_call.1} parent=11 // pred_region
          %s299 = ssub.s32 16, 16
          %300 = vsyncadd [#allocation9], %s299
          %s302 = sshll.u32 [#allocation10], 4
          %s303 = int_to_ptr.vmem [resolvable:$true] %s302
          %305 = dma.hbm_to_vmem [thread:$0]  %s4, 16, %s303, [#allocation9]
        $region28: #{tpu_custom_call.1} parent=11 // pred_fallthru
          _
        // Predicated region
        $region29: #{tpu_custom_call.1} parent=11 // pred_check
          %p306 = pneg %p156
        $region30: #{tpu_custom_call.1} parent=11 // pred_check_branch
          %308 = sbr.rel (%p306) target = $region32
        $region31: #{tpu_custom_call.1} parent=11 // pred_region
          %s310 = ssub.s32 512, 512
          %311 = vsyncadd [#allocation12], %s310
          %s312 = sshll.u32 [#allocation11], 4
          %s313 = int_to_ptr.vmem [resolvable:$true] %s312
          %318 = dma.hbm_to_vmem [thread:$0]  %s5, 512, %s313, [#allocation12], 64, 64, 4
        $region32: #{tpu_custom_call.1} parent=11 // pred_fallthru
          _
        // Predicated region
        $region33: #{tpu_custom_call.1} parent=11 // pred_check
          %p319 = pneg %p177
        $region34: #{tpu_custom_call.1} parent=11 // pred_check_branch
          %321 = sbr.rel (%p319) target = $region36
        $region35: #{tpu_custom_call.1} parent=11 // pred_region
          %s323 = ssub.s32 16, 16
          %324 = vsyncadd [#allocation12], %s323
          %s326 = sshll.u32 [#allocation13], 4
          %s327 = int_to_ptr.vmem [resolvable:$true] %s326
          %329 = dma.hbm_to_vmem [thread:$0]  %s6, 16, %s327, [#allocation12]
        $region36: #{tpu_custom_call.1} parent=11 // pred_fallthru
          _
        // Predicated region
        $region37: #{tpu_custom_call.1} parent=11 // pred_check
          %p330 = pneg %p198
        $region38: #{tpu_custom_call.1} parent=11 // pred_check_branch
          %332 = sbr.rel (%p330) target = $region40
        $region39: #{tpu_custom_call.1} parent=11 // pred_region
          %s334 = ssub.s32 1024, 1024
          %335 = vsyncadd [#allocation15], %s334
          %s336 = sshll.u32 [#allocation14], 4
          %s337 = int_to_ptr.vmem [resolvable:$true] %s336
          %342 = dma.hbm_to_vmem [thread:$0]  %s7, 1024, %s337, [#allocation15], 64, 64, 4
        $region40: #{tpu_custom_call.1} parent=11 // pred_fallthru
          _
        // Predicated region
        $region41: #{tpu_custom_call.1} parent=11 // pred_check
          %p343 = pneg %p219
        $region42: #{tpu_custom_call.1} parent=11 // pred_check_branch
          %345 = sbr.rel (%p343) target = $region44
        $region43: #{tpu_custom_call.1} parent=11 // pred_region
          %s347 = ssub.s32 16, 16
          %348 = vsyncadd [#allocation15], %s347
          %s350 = sshll.u32 [#allocation16], 4
          %s351 = int_to_ptr.vmem [resolvable:$true] %s350
          %353 = dma.hbm_to_vmem [thread:$0]  %s8, 16, %s351, [#allocation15]
        $region44: #{tpu_custom_call.1} parent=11 // pred_fallthru
          _
      $region12: #{tpu_custom_call.1} parent=5 // pred_fallthru
        _
      %p354 = scmp.lt.s32.totalorder %s25, 2
      // Predicated region
      $region45: #{tpu_custom_call.1} parent=5 // pred_check
        %p355 = pneg %p354
      $region46: #{tpu_custom_call.1} parent=5 // pred_check_branch
        %357 = sbr.rel (%p355) target = $region48
      $region47: #{tpu_custom_call.1} parent=5 // pred_region
        // Predicated region
        $region49: #{tpu_custom_call.1} parent=47 // pred_check
          %p358 = pneg %p45
        $region50: #{tpu_custom_call.1} parent=47 // pred_check_branch
          %360 = sbr.rel (%p358) target = $region52
        $region51: #{tpu_custom_call.1} parent=47 // pred_region
          %s361 = sand.u32 %s35, 1
          %s362 = scalar_lea.sflag [#allocation3], %s361
          %s363 = sand.u32 %s35, 1
          %s364 = smul.addr %s363, 8
          %s365 = scalar_lea.vmem [#allocation2], %s364
          %s367 = ssub.s32 128, 128
          %368 = vsyncadd %s362, %s367
          %s369 = smul.addr %s25, 128
          %s370 = scalar_lea.hbm %s0, %s369
          %s372 = sshll.u32 %s365, 4
          %s373 = int_to_ptr.vmem [resolvable:$true] %s372
          %375 = dma.hbm_to_vmem [thread:$0]  %s370, 128, %s373, %s362
        $region52: #{tpu_custom_call.1} parent=47 // pred_fallthru
          _
      $region48: #{tpu_custom_call.1} parent=5 // pred_fallthru
        _
      %p376 = scmp.le.s32.totalorder 1, %s25
      %p377 = scmp.lt.s32.totalorder %s25, 3
      %p378 = pnand %p376, %p377
      %p379 = pneg %p378
      // Predicated region
      $region53: #{tpu_custom_call.1} parent=5 // pred_check
        _
      $region54: #{tpu_custom_call.1} parent=5 // pred_check_branch
        %381 = sbr.rel (%p378) target = $region56
      $region55: #{tpu_custom_call.1} parent=5 // pred_region
        %s382 = ssub.s32 %s25, 1
        %s383 = sand.u32 %s38, 1
        %s384 = scalar_lea.sflag [#allocation3], %s383
        %s385 = sand.u32 %s38, 1
        %s386 = smul.addr %s385, 8
        %s387 = scalar_lea.vmem [#allocation2], %s386
        // Predicated region
        $region57: #{tpu_custom_call.1} parent=55 // pred_check
          %p388 = pneg %p51
        $region58: #{tpu_custom_call.1} parent=55 // pred_check_branch
          %390 = sbr.rel (%p388) target = $region60
        $region59: #{tpu_custom_call.1} parent=55 // pred_region
          %391 = dma.done %s384, 128
        $region60: #{tpu_custom_call.1} parent=55 // pred_fallthru
          _
        // Predicated region
        $region61: #{tpu_custom_call.1} parent=55 // pred_check
          %p392 = pneg %p72
        $region62: #{tpu_custom_call.1} parent=55 // pred_check_branch
          %394 = sbr.rel (%p392) target = $region64
        $region63: #{tpu_custom_call.1} parent=55 // pred_region
          %395 = dma.done [#allocation6], 256
        $region64: #{tpu_custom_call.1} parent=55 // pred_fallthru
          _
        // Predicated region
        $region65: #{tpu_custom_call.1} parent=55 // pred_check
          %p396 = pneg %p93
        $region66: #{tpu_custom_call.1} parent=55 // pred_check_branch
          %398 = sbr.rel (%p396) target = $region68
        $region67: #{tpu_custom_call.1} parent=55 // pred_region
          %399 = dma.done [#allocation6], 16
        $region68: #{tpu_custom_call.1} parent=55 // pred_fallthru
          _
        // Predicated region
        $region69: #{tpu_custom_call.1} parent=55 // pred_check
          %p400 = pneg %p114
        $region70: #{tpu_custom_call.1} parent=55 // pred_check_branch
          %402 = sbr.rel (%p400) target = $region72
        $region71: #{tpu_custom_call.1} parent=55 // pred_region
          %403 = dma.done [#allocation9], 16
        $region72: #{tpu_custom_call.1} parent=55 // pred_fallthru
          _
        // Predicated region
        $region73: #{tpu_custom_call.1} parent=55 // pred_check
          %p404 = pneg %p135
        $region74: #{tpu_custom_call.1} parent=55 // pred_check_branch
          %406 = sbr.rel (%p404) target = $region76
        $region75: #{tpu_custom_call.1} parent=55 // pred_region
          %407 = dma.done [#allocation9], 16
        $region76: #{tpu_custom_call.1} parent=55 // pred_fallthru
          _
        // Predicated region
        $region77: #{tpu_custom_call.1} parent=55 // pred_check
          %p408 = pneg %p156
        $region78: #{tpu_custom_call.1} parent=55 // pred_check_branch
          %410 = sbr.rel (%p408) target = $region80
        $region79: #{tpu_custom_call.1} parent=55 // pred_region
          %411 = dma.done [#allocation12], 512
        $region80: #{tpu_custom_call.1} parent=55 // pred_fallthru
          _
        // Predicated region
        $region81: #{tpu_custom_call.1} parent=55 // pred_check
          %p412 = pneg %p177
        $region82: #{tpu_custom_call.1} parent=55 // pred_check_branch
          %414 = sbr.rel (%p412) target = $region84
        $region83: #{tpu_custom_call.1} parent=55 // pred_region
          %415 = dma.done [#allocation12], 16
        $region84: #{tpu_custom_call.1} parent=55 // pred_fallthru
          _
        // Predicated region
        $region85: #{tpu_custom_call.1} parent=55 // pred_check
          %p416 = pneg %p198
        $region86: #{tpu_custom_call.1} parent=55 // pred_check_branch
          %418 = sbr.rel (%p416) target = $region88
        $region87: #{tpu_custom_call.1} parent=55 // pred_region
          %419 = dma.done [#allocation15], 1024
        $region88: #{tpu_custom_call.1} parent=55 // pred_fallthru
          _
        // Predicated region
        $region89: #{tpu_custom_call.1} parent=55 // pred_check
          %p420 = pneg %p219
        $region90: #{tpu_custom_call.1} parent=55 // pred_check_branch
          %422 = sbr.rel (%p420) target = $region92
        $region91: #{tpu_custom_call.1} parent=55 // pred_region
          %423 = dma.done [#allocation15], 16
        $region92: #{tpu_custom_call.1} parent=55 // pred_fallthru
          _
        %s424 = sand.u32 %s38, 1
        %s425 = scalar_lea.sflag [#allocation3], %s424
        %s426 = sand.u32 %s38, 1
        %s427 = smul.addr %s426, 8
        %s428 = scalar_lea.vmem [#allocation2], %s427
        %p429 = pneg %p51
        %p430 = pneg %p48
        %p431 = pneg %p72
        %p432 = pneg %p69
        %p433 = pneg %p93
        %p434 = pneg %p90
        %p435 = pneg %p114
        %p436 = pneg %p111
        %p437 = pneg %p135
        %p438 = pneg %p132
        %p439 = pneg %p156
        %p440 = pneg %p153
        %p441 = pneg %p177
        %p442 = pneg %p174
        %p443 = pneg %p198
        %p444 = pneg %p195
        %p445 = pneg %p219
        %p446 = pneg %p216
        %p447 = pneg %p245
        %p448 = pneg %p242
        %s449 = sand.u32 %s232, 1
        %s450 = scalar_lea.sflag [#allocation4], %s449
        %s451 = sand.u32 %s232, 1
        %s452 = smul.addr %s451, 8
        %s453 = scalar_lea.vmem [#allocation17], %s452
        %v455 = vld [vmem:[%s387] sm:$0xff]
        %v456 = vpack.c.bf16 %v455, %v455
        %v457 = vld [vmem:[#allocation5] sm:$0xf]
        %v458 = vld [vmem:[#allocation5 + $0x4] sm:$0xf]
        %v459 = vld [vmem:[#allocation5 + $0x8] sm:$0xf]
        %v460 = vld [vmem:[#allocation5 + $0xc] sm:$0xf]
        %v461 = vld [vmem:[#allocation7] sm:$0x1]
        %v463 = vlaneseq
        %v464 = vshrl.u32 %v463, 7
        %v465 = vsub.s32 0, %v464
        %v466 = vrot.slane %v461, %v465
        %v472 = vunpack.c.l.b16 %v457
        %v473 = vunpack.c.l.b16 %v458
        %v474 = vunpack.c.l.b16 %v459
        %v475 = vunpack.c.l.b16 %v460
        %v476 = vpack.c.b16 %v473, %v472
        %v477 = vpack.c.b16 %v475, %v474
        %vm480 = vcmask 261120
        %v482 = vsel %vm480, %v456, 0
        %484 = vmatprep.subr.bf16.mxu0 0
        %485 = vmatpush1.bf16.msra.mxu0 %v476
        %486 = vmatprep.subr.bf16.mxu0 0
        %487 = vmatpush1.bf16.msra.mxu0 %v477
        %488 = vmatprep.subr.bf16.mxu0 0
        %489 = vmatpush1.bf16.msra.mxu0 0
        %490 = vmatprep.subr.bf16.mxu0 0
        %491 = vmatpush1.bf16.msra.mxu0 0
        %492 = vmatprep.subr.bf16.mxu0 0
        %493 = vmatpush1.bf16.msra.mxu0 0
        %494 = vmatprep.subr.bf16.mxu0 0
        %495 = vmatpush1.bf16.msra.mxu0 0
        %496 = vmatprep.subr.bf16.mxu0 0
        %497 = vmatpush1.bf16.msra.mxu0 0
        %498 = vmatprep.subr.bf16.mxu0 0
        %499 = vmatpush1.bf16.msra.mxu0 0
        %500 = vmatprep.subr.bf16.mxu0 0
        %501 = vmatpush1.bf16.msra.mxu0 0
        %502 = vmatprep.subr.bf16.mxu0 0
        %503 = vmatpush1.bf16.msra.mxu0 0
        %504 = vmatprep.subr.bf16.mxu0 0
        %505 = vmatpush1.bf16.msra.mxu0 0
        %506 = vmatprep.subr.bf16.mxu0 0
        %507 = vmatpush1.bf16.msra.mxu0 0
        %508 = vmatprep.subr.bf16.mxu0 0
        %509 = vmatpush1.bf16.msra.mxu0 0
        %510 = vmatprep.subr.bf16.mxu0 0
        %511 = vmatpush1.bf16.msra.mxu0 0
        %512 = vmatprep.subr.bf16.mxu0 0
        %513 = vmatpush1.bf16.msra.mxu0 0
        %514 = vmatprep.subr.bf16.mxu0 0
        %515 = vmatpush1.bf16.msra.mxu0 0
        %516 = vmatprep.mubr.bf16.mxu0 0
        %517 = vmatmul.mubr.bf16.gmra.mrb[0].mxu0 %v482
        %v518 = vpop.f32.mrb[0].mxu0
        %v519 = vadd.f32 %v466, %v518
        %v520 = vpop.f32.mrb[0].mxu0
        %v521 = vpop.f32.mrb[0].mxu0
        %v522 = vpop.f32.mrb[0].mxu0
        %523 = vdwg.mxu0
        %vm524 = vcmask 523264
        %v525 = vsel %vm524, %v519, 0.0
        %526 = vadd.xlane.f32.xlu0 %v525
        %v527 = vpop.xlane.xlu0 %526
        %v528 = vrcp.pop 64.0
        %v529 = vmul.f32 %v527, %v528
        %v530 = vmul.f32 %v519, %v519
        %v531 = vsel %vm524, %v530, 0.0
        %532 = vadd.xlane.f32.xlu0 %v531
        %v533 = vpop.xlane.xlu0 %532
        %v534 = vmul.f32 %v533, %v528
        %v535 = vmul.f32 %v529, %v529
        %v536 = vsub.f32 %v534, %v535
        %v537 = vmax.f32 %v536, 0.0
        %v538 = vsub.f32 %v519, %v529
        %v539 = vadd.f32 %v537, 1e-05
        %v540 = vrsqrt.pop %v539
        %v541 = vmul.f32 %v538, %v540
        %v542 = vld [vmem:[#allocation8] sm:$0x1]
        %v544 = vlaneseq
        %v545 = vshrl.u32 %v544, 7
        %v546 = vsub.s32 0, %v545
        %v547 = vrot.slane %v542, %v546
        %v549 = vmul.f32 %v541, %v547
        %v550 = vld [vmem:[#allocation10] sm:$0x1]
        %v552 = vlaneseq
        %v553 = vshrl.u32 %v552, 7
        %v554 = vsub.s32 0, %v553
        %v555 = vrot.slane %v550, %v554
        %v557 = vadd.f32 %v549, %v555
        %v558 = vpack.c.bf16 %v557, %v557
        %v559 = vld [vmem:[#allocation11] sm:$0xf]
        %v560 = vld [vmem:[#allocation11 + $0x4] sm:$0xf]
        %v561 = vld [vmem:[#allocation11 + $0x8] sm:$0xf]
        %v562 = vld [vmem:[#allocation11 + $0xc] sm:$0xf]
        %v563 = vld [vmem:[#allocation11 + $0x10] sm:$0xf]
        %v564 = vld [vmem:[#allocation11 + $0x14] sm:$0xf]
        %v565 = vld [vmem:[#allocation11 + $0x18] sm:$0xf]
        %v566 = vld [vmem:[#allocation11 + $0x1c] sm:$0xf]
        %v567 = vld [vmem:[#allocation13] sm:$0x1]
        %v569 = vlaneseq
        %v570 = vshrl.u32 %v569, 7
        %v571 = vsub.s32 0, %v570
        %v572 = vrot.slane %v567, %v571
        %v582 = vunpack.c.l.b16 %v559
        %v583 = vunpack.c.l.b16 %v560
        %v584 = vunpack.c.l.b16 %v561
        %v585 = vunpack.c.l.b16 %v562
        %v586 = vunpack.c.l.b16 %v563
        %v587 = vunpack.c.l.b16 %v564
        %v588 = vunpack.c.l.b16 %v565
        %v589 = vunpack.c.l.b16 %v566
        %v590 = vpack.c.b16 %v583, %v582
        %v591 = vpack.c.b16 %v585, %v584
        %v592 = vpack.c.b16 %v587, %v586
        %v593 = vpack.c.b16 %v589, %v588
        %v599 = vsel %vm524, %v558, 0
        %601 = vmatprep.subr.bf16.mxu0 0
        %602 = vmatpush1.bf16.msra.mxu0 %v590
        %603 = vmatprep.subr.bf16.mxu0 0
        %604 = vmatpush1.bf16.msra.mxu0 %v591
        %605 = vmatprep.subr.bf16.mxu0 0
        %606 = vmatpush1.bf16.msra.mxu0 %v592
        %607 = vmatprep.subr.bf16.mxu0 0
        %608 = vmatpush1.bf16.msra.mxu0 %v593
        %609 = vmatprep.subr.bf16.mxu0 0
        %610 = vmatpush1.bf16.msra.mxu0 0
        %611 = vmatprep.subr.bf16.mxu0 0
        %612 = vmatpush1.bf16.msra.mxu0 0
        %613 = vmatprep.subr.bf16.mxu0 0
        %614 = vmatpush1.bf16.msra.mxu0 0
        %615 = vmatprep.subr.bf16.mxu0 0
        %616 = vmatpush1.bf16.msra.mxu0 0
        %617 = vmatprep.subr.bf16.mxu0 0
        %618 = vmatpush1.bf16.msra.mxu0 0
        %619 = vmatprep.subr.bf16.mxu0 0
        %620 = vmatpush1.bf16.msra.mxu0 0
        %621 = vmatprep.subr.bf16.mxu0 0
        %622 = vmatpush1.bf16.msra.mxu0 0
        %623 = vmatprep.subr.bf16.mxu0 0
        %624 = vmatpush1.bf16.msra.mxu0 0
        %625 = vmatprep.subr.bf16.mxu0 0
        %626 = vmatpush1.bf16.msra.mxu0 0
        %627 = vmatprep.subr.bf16.mxu0 0
        %628 = vmatpush1.bf16.msra.mxu0 0
        %629 = vmatprep.subr.bf16.mxu0 0
        %630 = vmatpush1.bf16.msra.mxu0 0
        %631 = vmatprep.subr.bf16.mxu0 0
        %632 = vmatpush1.bf16.msra.mxu0 0
        %633 = vmatprep.mubr.bf16.mxu0 0
        %634 = vmatmul.mubr.bf16.gmra.mrb[0].mxu0 %v599
        %v635 = vpop.f32.mrb[0].mxu0
        %v636 = vadd.f32 %v572, %v635
        %v637 = vpop.f32.mrb[0].mxu0
        %v638 = vpop.f32.mrb[0].mxu0
        %v639 = vpop.f32.mrb[0].mxu0
        %640 = vdwg.mxu0
        %v641 = vmul.f32 %v636, 0.5
        %v642 = vmul.f32 %v636, 0.70710677
        %v643 = verf.f32.pop %v642
        %v644 = vadd.f32 %v643, 1.0
        %v645 = vmul.f32 %v641, %v644
        %v646 = vpack.c.bf16 %v645, %v645
        %v647 = vld [vmem:[#allocation14] sm:$0xf]
        %v648 = vld [vmem:[#allocation14 + $0x4] sm:$0xf]
        %v649 = vld [vmem:[#allocation14 + $0x8] sm:$0xf]
        %v650 = vld [vmem:[#allocation14 + $0xc] sm:$0xf]
        %v651 = vld [vmem:[#allocation14 + $0x10] sm:$0xf]
        %v652 = vld [vmem:[#allocation14 + $0x14] sm:$0xf]
        %v653 = vld [vmem:[#allocation14 + $0x18] sm:$0xf]
        %v654 = vld [vmem:[#allocation14 + $0x1c] sm:$0xf]
        %v655 = vld [vmem:[#allocation14 + $0x20] sm:$0xf]
        %v656 = vld [vmem:[#allocation14 + $0x24] sm:$0xf]
        %v657 = vld [vmem:[#allocation14 + $0x28] sm:$0xf]
        %v658 = vld [vmem:[#allocation14 + $0x2c] sm:$0xf]
        %v659 = vld [vmem:[#allocation14 + $0x30] sm:$0xf]
        %v660 = vld [vmem:[#allocation14 + $0x34] sm:$0xf]
        %v661 = vld [vmem:[#allocation14 + $0x38] sm:$0xf]
        %v662 = vld [vmem:[#allocation14 + $0x3c] sm:$0xf]
        %v663 = vld [vmem:[#allocation16] sm:$0x1]
        %v665 = vlaneseq
        %v666 = vshrl.u32 %v665, 7
        %v667 = vsub.s32 0, %v666
        %v668 = vrot.slane %v663, %v667
        %v686 = vunpack.c.l.b16 %v647
        %v687 = vunpack.c.l.b16 %v648
        %v688 = vunpack.c.l.b16 %v649
        %v689 = vunpack.c.l.b16 %v650
        %v690 = vunpack.c.l.b16 %v651
        %v691 = vunpack.c.l.b16 %v652
        %v692 = vunpack.c.l.b16 %v653
        %v693 = vunpack.c.l.b16 %v654
        %v694 = vunpack.c.l.b16 %v655
        %v695 = vunpack.c.l.b16 %v656
        %v696 = vunpack.c.l.b16 %v657
        %v697 = vunpack.c.l.b16 %v658
        %v698 = vunpack.c.l.b16 %v659
        %v699 = vunpack.c.l.b16 %v660
        %v700 = vunpack.c.l.b16 %v661
        %v701 = vunpack.c.l.b16 %v662
        %v702 = vpack.c.b16 %v687, %v686
        %v703 = vpack.c.b16 %v689, %v688
        %v704 = vpack.c.b16 %v691, %v690
        %v705 = vpack.c.b16 %v693, %v692
        %v706 = vpack.c.b16 %v695, %v694
        %v707 = vpack.c.b16 %v697, %v696
        %v708 = vpack.c.b16 %v699, %v698
        %v709 = vpack.c.b16 %v701, %v700
        %718 = vmatprep.subr.bf16.mxu0 0
        %719 = vmatpush1.bf16.msra.mxu0 %v702
        %720 = vmatprep.subr.bf16.mxu0 0
        %721 = vmatpush1.bf16.msra.mxu0 %v703
        %722 = vmatprep.subr.bf16.mxu0 0
        %723 = vmatpush1.bf16.msra.mxu0 %v704
        %724 = vmatprep.subr.bf16.mxu0 0
        %725 = vmatpush1.bf16.msra.mxu0 %v705
        %726 = vmatprep.subr.bf16.mxu0 0
        %727 = vmatpush1.bf16.msra.mxu0 %v706
        %728 = vmatprep.subr.bf16.mxu0 0
        %729 = vmatpush1.bf16.msra.mxu0 %v707
        %730 = vmatprep.subr.bf16.mxu0 0
        %731 = vmatpush1.bf16.msra.mxu0 %v708
        %732 = vmatprep.subr.bf16.mxu0 0
        %733 = vmatpush1.bf16.msra.mxu0 %v709
        %734 = vmatprep.subr.bf16.mxu0 0
        %735 = vmatpush1.bf16.msra.mxu0 0
        %736 = vmatprep.subr.bf16.mxu0 0
        %737 = vmatpush1.bf16.msra.mxu0 0
        %738 = vmatprep.subr.bf16.mxu0 0
        %739 = vmatpush1.bf16.msra.mxu0 0
        %740 = vmatprep.subr.bf16.mxu0 0
        %741 = vmatpush1.bf16.msra.mxu0 0
        %742 = vmatprep.subr.bf16.mxu0 0
        %743 = vmatpush1.bf16.msra.mxu0 0
        %744 = vmatprep.subr.bf16.mxu0 0
        %745 = vmatpush1.bf16.msra.mxu0 0
        %746 = vmatprep.subr.bf16.mxu0 0
        %747 = vmatpush1.bf16.msra.mxu0 0
        %748 = vmatprep.subr.bf16.mxu0 0
        %749 = vmatpush1.bf16.msra.mxu0 0
        %750 = vmatprep.mubr.bf16.mxu0 0
        %751 = vmatmul.mubr.bf16.gmra.mrb[0].mxu0 %v646
        %v752 = vpop.f32.mrb[0].mxu0
        %v753 = vadd.f32 %v668, %v752
        %v754 = vpop.f32.mrb[0].mxu0
        %v755 = vpop.f32.mrb[0].mxu0
        %v756 = vpop.f32.mrb[0].mxu0
        %757 = vdwg.mxu0
        %758 = vst [vmem:[%s453] sm:$0xff] %v753
        %s759 = sand.u32 %s232, 1
        %s760 = scalar_lea.sflag [#allocation4], %s759
        %s761 = sand.u32 %s232, 1
        %s762 = smul.addr %s761, 8
        %s763 = scalar_lea.vmem [#allocation17], %s762
        // Predicated region
        $region93: #{tpu_custom_call.1} parent=55 // pred_check
          %p764 = pneg %p242
        $region94: #{tpu_custom_call.1} parent=55 // pred_check_branch
          %766 = sbr.rel (%p764) target = $region96
        $region95: #{tpu_custom_call.1} parent=55 // pred_region
          %s768 = ssub.s32 128, 128
          %769 = vsyncadd %s760, %s768
          %s770 = smul.addr %s30, 128
          %s771 = scalar_lea.hbm %s9, %s770
          %s773 = sshll.u32 %s763, 4
          %s774 = int_to_ptr.vmem [resolvable:$true] %s773
          %776 = dma.vmem_to_hbm [thread:$0]  %s774, 128, %s771, %s760
        $region96: #{tpu_custom_call.1} parent=55 // pred_fallthru
          _
      $region56: #{tpu_custom_call.1} parent=5 // pred_fallthru
        _
      %p777 = scmp.le.s32.totalorder 2, %s25
      // Predicated region
      $region97: #{tpu_custom_call.1} parent=5 // pred_check
        %p778 = pneg %p777
      $region98: #{tpu_custom_call.1} parent=5 // pred_check_branch
        %780 = sbr.rel (%p778) target = $region100
      $region99: #{tpu_custom_call.1} parent=5 // pred_region
        %s781 = ssub.s32 %s25, 2
        // Predicated region
        $region101: #{tpu_custom_call.1} parent=99 // pred_check
          %p782 = pneg %p248
        $region102: #{tpu_custom_call.1} parent=99 // pred_check_branch
          %784 = sbr.rel (%p782) target = $region104
        $region103: #{tpu_custom_call.1} parent=99 // pred_region
          %s785 = sand.u32 %s233, 1
          %s786 = scalar_lea.sflag [#allocation4], %s785
          %s787 = sand.u32 %s233, 1
          %s788 = smul.addr %s787, 8
          %s789 = scalar_lea.vmem [#allocation17], %s788
          %790 = dma.done %s786, 128
        $region104: #{tpu_custom_call.1} parent=99 // pred_fallthru
          _
      $region100: #{tpu_custom_call.1} parent=5 // pred_fallthru
        _
    $region6: #{tpu_custom_call.1} parent=1 // loop_footer
      %s29 = sadd.s32 1, %s25
    $region7: #{tpu_custom_call.1} parent=1 // loop_footer_branch
      %24 = sbr.rel target = $region3
    $region8: #{tpu_custom_call.1} parent=1 // loop_exit
      _
    %791 = vsyncpa [#allocation3], 1
    %s792 = scalar_lea.sflag [#allocation3], 1
    %793 = vsyncpa %s792, 1
    %794 = vsyncpa [#allocation6], 1
    %795 = vsyncpa [#allocation9], 1
    %796 = vsyncpa [#allocation12], 1
    %797 = vsyncpa [#allocation15], 1
    %798 = vsyncpa [#allocation4], 1
    %s799 = scalar_lea.sflag [#allocation4], 1
    %800 = vsyncpa %s799, 1

</llo_original>
